<compile_context>
chip_gen: v6e
topology: v6e:2x2x1
jax: 0.10.0
libtpu: 0.0.40
codegen_flags: <defaults>
</compile_context>

<pallas_src>
import functools

import jax
import jax.numpy as jnp
from jax.experimental import pallas as pl
from jax.experimental.pallas import tpu as pltpu


def mlp_kernel(ids_ref, ut_ref, it_ref, w1u_ref, w1i_ref, w2_ref, w3_ref, o_ref):
    # ids_ref: (2, TB)  int32   row 0 = user ids, row 1 = item ids (streamed)
    # ut_ref:  (E, n_users)     user_embedding.weight^T   (VMEM resident)
    # it_ref:  (E, n_items)     item_embedding.weight^T   (VMEM resident)
    # w1u_ref: (32, E)          fc1.weight[:, :E]         (VMEM resident)
    # w1i_ref: (32, E)          fc1.weight[:, E:]         (VMEM resident)
    # w2_ref:  (16, 32)         fc2.weight
    # w3_ref:  (1, 16)          fc3.weight
    # o_ref:   (1, TB)          sigmoid(fc3(...)) for this batch tile
    tb = ids_ref.shape[1]
    n_users = ut_ref.shape[1]
    n_items = it_ref.shape[1]

    uids = ids_ref[0:1, :]                                         # (1, TB)
    iids = ids_ref[1:2, :]                                         # (1, TB)

    # One-hot gather on the MXU (vocab is tiny and tables are VMEM resident).
    # TODO(synk): for large vocabularies replace the one-hot contraction with a
    # scalar-prefetched / manual-DMA row gather.
    u_iota = jax.lax.broadcasted_iota(jnp.int32, (n_users, tb), 0)
    onehot_u = (u_iota == uids).astype(jnp.float32)                # (n_users, TB)
    i_iota = jax.lax.broadcasted_iota(jnp.int32, (n_items, tb), 0)
    onehot_i = (i_iota == iids).astype(jnp.float32)                # (n_items, TB)

    user_e = jnp.dot(ut_ref[...], onehot_u,
                     preferred_element_type=jnp.float32)           # (E, TB)
    item_e = jnp.dot(it_ref[...], onehot_i,
                     preferred_element_type=jnp.float32)           # (E, TB)

    # fc1 + relu : the concat is folded into two contractions over split w1.
    h1 = (jnp.dot(w1u_ref[...], user_e, preferred_element_type=jnp.float32)
          + jnp.dot(w1i_ref[...], item_e, preferred_element_type=jnp.float32))
    h1 = jnp.maximum(h1, 0.0)                                      # (32, TB)

    # fc2 + relu
    h2 = jnp.dot(w2_ref[...], h1, preferred_element_type=jnp.float32)
    h2 = jnp.maximum(h2, 0.0)                                      # (16, TB)

    # fc3 + sigmoid : (1,16)@(16,TB) keeps MXU output width = batch tile.
    logits = jnp.dot(w3_ref[...], h2, preferred_element_type=jnp.float32)
    o_ref[...] = jax.nn.sigmoid(logits)                            # (1, TB)


@functools.partial(jax.jit, static_argnames=("tile_b",))
def mlp_forward(x_ids, user_emb_table, item_emb_table, w1, w2, w3, *, tile_b=1024):
    """x_ids: (B, 2) int32 -> (B, 1) float32 predictions."""
    B = x_ids.shape[0]
    n_users, E = user_emb_table.shape
    n_items = item_emb_table.shape[0]

    # Batch tile: lane-dense multiple of 256, capped at tile_b; for small
    # batches shrink so padded tiles don't dominate (never below 256).
    tb = max(256, min(tile_b, ((B + 255) // 256) * 256))
    n_tiles = pl.cdiv(B, tb)
    b_pad = n_tiles * tb

    # Only int32 ids are streamed: transpose to (2, B) (8 B/sample) and pad the
    # batch to the tile multiple.  Padded ids are 0 (a valid table row), and
    # the corresponding output columns are sliced off below.
    ids_t = x_ids.astype(jnp.int32).T                              # (2, B)
    ids_t = jnp.pad(ids_t, ((0, 0), (0, b_pad - B)))               # (2, B_pad)

    # Parameter plumbing (all tiny, VMEM resident inside the kernel).
    ut = user_emb_table.T                                          # (E, n_users)
    it = item_emb_table.T                                          # (E, n_items)
    w1u = w1[:, :E]                                                # (32, E)
    w1i = w1[:, E:]                                                # (32, E)

    out_t = pl.pallas_call(
        mlp_kernel,
        out_shape=jax.ShapeDtypeStruct((1, b_pad), jnp.float32),
        grid=(n_tiles,),
        in_specs=[
            pl.BlockSpec((2, tb), lambda i: (0, i)),               # id stream
            pl.BlockSpec((E, n_users), lambda i: (0, 0)),          # resident
            pl.BlockSpec((E, n_items), lambda i: (0, 0)),          # resident
            pl.BlockSpec((32, E), lambda i: (0, 0)),               # resident
            pl.BlockSpec((32, E), lambda i: (0, 0)),               # resident
            pl.BlockSpec((16, 32), lambda i: (0, 0)),              # resident
            pl.BlockSpec((1, 16), lambda i: (0, 0)),               # resident
        ],
        out_specs=pl.BlockSpec((1, tb), lambda i: (0, i)),
        compiler_params=pltpu.CompilerParams(
            dimension_semantics=("parallel",),
        ),
    )(ids_t, ut, it, w1u, w1i, w2, w3)

    # Drop batch padding and restore (B, 1).
    return out_t[0, :B][:, None]


def reference_forward(x_ids, user_emb_table, item_emb_table, w1, w2, w3):
    user_e = jnp.take(user_emb_table, x_ids[:, 0], axis=0)
    item_e = jnp.take(item_emb_table, x_ids[:, 1], axis=0)
    h = jnp.concatenate([user_e, item_e], axis=1)
    h = jnp.maximum(h @ w1.T, 0.0)
    h = jnp.maximum(h @ w2.T, 0.0)
    return jax.nn.sigmoid(h @ w3.T)


if __name__ == "__main__":
    # Hyperparameters (small, consistent with the module's __init__).
    n_users = 10
    n_items = 12
    embedding_dim = 16

    key = jax.random.PRNGKey(0)
    k_u, k_i, k_w1, k_w2, k_w3, k_ids = jax.random.split(key, 6)

    # Deterministic synthetic parameters (PyTorch Linear layout: [out, in]).
    user_emb_table = jax.random.normal(k_u, (n_users, embedding_dim), jnp.float32) * 0.1
    item_emb_table = jax.random.normal(k_i, (n_items, embedding_dim), jnp.float32) * 0.1
    w1 = jax.random.normal(k_w1, (32, 2 * embedding_dim), jnp.float32) * 0.1  # fc1.weight
    w2 = jax.random.normal(k_w2, (16, 32), jnp.float32) * 0.1                  # fc2.weight
    w3 = jax.random.normal(k_w3, (1, 16), jnp.float32) * 0.1                   # fc3.weight

    # batch=8 is the toy case; batch=300 exercises padding of a single tile;
    # batch=3000 exercises a multi-step (multi-TensorCore-capable) grid.
    for batch in (8, 300, 3000):
        k_ids, k_u_ids, k_i_ids = jax.random.split(k_ids, 3)
        users = jax.random.randint(k_u_ids, (batch,), 0, n_users, jnp.int32)
        items = jax.random.randint(k_i_ids, (batch,), 0, n_items, jnp.int32)
        x_ids = jnp.stack([users, items], axis=1)   # (B, 2): col0=user, col1=item

        out = mlp_forward(x_ids, user_emb_table, item_emb_table, w1, w2, w3)
        out = jax.block_until_ready(out)
        ref = reference_forward(x_ids, user_emb_table, item_emb_table, w1, w2, w3)

        assert out.shape == (batch, 1)
        assert jnp.allclose(out, ref, atol=1e-5, rtol=1e-5), (
            f"mismatch at batch={batch}: max abs err "
            f"{float(jnp.max(jnp.abs(out - ref))):.3e}"
        )

    print("KERNEL_OK")
</pallas_src>

<mosaic_0001>
module attributes {stable_mosaic.version = 11 : i64} {
  func.func @mlp_kernel(%arg0: i32, %arg1: memref<2x256xi32, #tpu.memory_space<vmem>>, %arg2: memref<16x10xf32, #tpu.memory_space<vmem>>, %arg3: memref<16x12xf32, #tpu.memory_space<vmem>>, %arg4: memref<32x16xf32, #tpu.memory_space<vmem>>, %arg5: memref<32x16xf32, #tpu.memory_space<vmem>>, %arg6: memref<16x32xf32, #tpu.memory_space<vmem>>, %arg7: memref<1x16xf32, #tpu.memory_space<vmem>>, %arg8: memref<1x256xf32, #tpu.memory_space<vmem>>) attributes {dimension_semantics = [#tpu.dimension_semantics<parallel>], iteration_bounds = array<i64: 1>, scalar_prefetch = 0 : i64, scratch_operands = 0 : i64, tpu.core_type = #tpu.core_type<tc>, window_params = [{transform_indices = @transform_0, window_bounds = array<i64: 2, 256>}, {pipeline_mode = #tpu.pipeline_mode<synchronous>, transform_indices = @transform_1, window_bounds = array<i64: 16, 10>}, {pipeline_mode = #tpu.pipeline_mode<synchronous>, transform_indices = @transform_2, window_bounds = array<i64: 16, 12>}, {pipeline_mode = #tpu.pipeline_mode<synchronous>, transform_indices = @transform_3, window_bounds = array<i64: 32, 16>}, {pipeline_mode = #tpu.pipeline_mode<synchronous>, transform_indices = @transform_4, window_bounds = array<i64: 32, 16>}, {pipeline_mode = #tpu.pipeline_mode<synchronous>, transform_indices = @transform_5, window_bounds = array<i64: 16, 32>}, {pipeline_mode = #tpu.pipeline_mode<synchronous>, transform_indices = @transform_6, window_bounds = array<i64: 1, 16>}, {transform_indices = @transform_7, window_bounds = array<i64: 1, 256>}]} {
    %c0 = arith.constant 0 : index
    %c0_0 = arith.constant 0 : index
    %0 = vector.load %arg1[%c0, %c0_0] : memref<2x256xi32, #tpu.memory_space<vmem>>, vector<1x256xi32>
    %c1 = arith.constant 1 : index
    %c0_1 = arith.constant 0 : index
    %1 = vector.load %arg1[%c1, %c0_1] : memref<2x256xi32, #tpu.memory_space<vmem>>, vector<1x256xi32>
    %2 = tpu.iota {dimensions = array<i32: 0>} : vector<10x256xi32>
    %3 = vector.broadcast %0 : vector<1x256xi32> to vector<10x256xi32>
    %4 = arith.cmpi eq, %2, %3 : vector<10x256xi32>
    %5 = arith.extui %4 : vector<10x256xi1> to vector<10x256xi32>
    %6 = arith.sitofp %5 : vector<10x256xi32> to vector<10x256xf32>
    %7 = tpu.iota {dimensions = array<i32: 0>} : vector<12x256xi32>
    %8 = vector.broadcast %1 : vector<1x256xi32> to vector<12x256xi32>
    %9 = arith.cmpi eq, %7, %8 : vector<12x256xi32>
    %10 = arith.extui %9 : vector<12x256xi1> to vector<12x256xi32>
    %11 = arith.sitofp %10 : vector<12x256xi32> to vector<12x256xf32>
    %c0_2 = arith.constant 0 : index
    %c0_3 = arith.constant 0 : index
    %12 = vector.load %arg2[%c0_2, %c0_3] : memref<16x10xf32, #tpu.memory_space<vmem>>, vector<16x10xf32>
    %cst = arith.constant dense<0.000000e+00> : vector<16x256xf32>
    %13 = tpu.matmul %12, %6, %cst {dimension_numbers = #tpu.dot_dimension_numbers<[1], [0], [0], [1], [0, 0, 1, 1], [], []>} : vector<16x10xf32>, vector<10x256xf32>, vector<16x256xf32> -> vector<16x256xf32>
    %c0_4 = arith.constant 0 : index
    %c0_5 = arith.constant 0 : index
    %14 = vector.load %arg3[%c0_4, %c0_5] : memref<16x12xf32, #tpu.memory_space<vmem>>, vector<16x12xf32>
    %cst_6 = arith.constant dense<0.000000e+00> : vector<16x256xf32>
    %15 = tpu.matmul %14, %11, %cst_6 {dimension_numbers = #tpu.dot_dimension_numbers<[1], [0], [0], [1], [0, 0, 1, 1], [], []>} : vector<16x12xf32>, vector<12x256xf32>, vector<16x256xf32> -> vector<16x256xf32>
    %c0_7 = arith.constant 0 : index
    %c0_8 = arith.constant 0 : index
    %16 = vector.load %arg4[%c0_7, %c0_8] : memref<32x16xf32, #tpu.memory_space<vmem>>, vector<32x16xf32>
    %cst_9 = arith.constant dense<0.000000e+00> : vector<32x256xf32>
    %17 = tpu.matmul %16, %13, %cst_9 {dimension_numbers = #tpu.dot_dimension_numbers<[1], [0], [0], [1], [0, 0, 1, 1], [], []>} : vector<32x16xf32>, vector<16x256xf32>, vector<32x256xf32> -> vector<32x256xf32>
    %c0_10 = arith.constant 0 : index
    %c0_11 = arith.constant 0 : index
    %18 = vector.load %arg5[%c0_10, %c0_11] : memref<32x16xf32, #tpu.memory_space<vmem>>, vector<32x16xf32>
    %cst_12 = arith.constant dense<0.000000e+00> : vector<32x256xf32>
    %19 = tpu.matmul %18, %15, %cst_12 {dimension_numbers = #tpu.dot_dimension_numbers<[1], [0], [0], [1], [0, 0, 1, 1], [], []>} : vector<32x16xf32>, vector<16x256xf32>, vector<32x256xf32> -> vector<32x256xf32>
    %20 = arith.addf %17, %19 : vector<32x256xf32>
    %cst_13 = arith.constant 0.000000e+00 : f32
    %21 = vector.broadcast %cst_13 : f32 to vector<32x256xf32>
    %22 = arith.maximumf %20, %21 : vector<32x256xf32>
    %c0_14 = arith.constant 0 : index
    %c0_15 = arith.constant 0 : index
    %23 = vector.load %arg6[%c0_14, %c0_15] : memref<16x32xf32, #tpu.memory_space<vmem>>, vector<16x32xf32>
    %cst_16 = arith.constant dense<0.000000e+00> : vector<16x256xf32>
    %24 = tpu.matmul %23, %22, %cst_16 {dimension_numbers = #tpu.dot_dimension_numbers<[1], [0], [0], [1], [0, 0, 1, 1], [], []>} : vector<16x32xf32>, vector<32x256xf32>, vector<16x256xf32> -> vector<16x256xf32>
    %cst_17 = arith.constant 0.000000e+00 : f32
    %25 = vector.broadcast %cst_17 : f32 to vector<16x256xf32>
    %26 = arith.maximumf %24, %25 : vector<16x256xf32>
    %c0_18 = arith.constant 0 : index
    %c0_19 = arith.constant 0 : index
    %27 = vector.load %arg7[%c0_18, %c0_19] : memref<1x16xf32, #tpu.memory_space<vmem>>, vector<1x16xf32>
    %cst_20 = arith.constant dense<0.000000e+00> : vector<1x256xf32>
    %28 = tpu.matmul %27, %26, %cst_20 {dimension_numbers = #tpu.dot_dimension_numbers<[1], [0], [0], [1], [0, 0, 1, 1], [], []>} : vector<1x16xf32>, vector<16x256xf32>, vector<1x256xf32> -> vector<1x256xf32>
    %29 = arith.negf %28 : vector<1x256xf32>
    %30 = math.exp %29 : vector<1x256xf32>
    %cst_21 = arith.constant 1.000000e+00 : f32
    %31 = vector.broadcast %cst_21 : f32 to vector<1x256xf32>
    %32 = arith.addf %31, %30 : vector<1x256xf32>
    %33 = arith.divf %31, %32 : vector<1x256xf32>
    %c0_22 = arith.constant 0 : index
    %c0_23 = arith.constant 0 : index
    %34 = vector.load %arg8[%c0_22, %c0_23] : memref<1x256xf32, #tpu.memory_space<vmem>>, vector<1x256xf32>
    tpu.vector_store %arg8[%c0_22, %c0_23], %33 {strides = array<i32>} : memref<1x256xf32, #tpu.memory_space<vmem>>, vector<1x256xf32>,
    return
  }
  func.func @transform_0(%arg0: i32) -> (i32, i32) {
    %c0_i32 = arith.constant 0 : i32
    %c0_i32_0 = arith.constant 0 : i32
    return %c0_i32, %arg0 : i32, i32
  }
  func.func @transform_1(%arg0: i32) -> (i32, i32) {
    %c0_i32 = arith.constant 0 : i32
    %c0_i32_0 = arith.constant 0 : i32
    %c0_i32_1 = arith.constant 0 : i32
    return %c0_i32, %c0_i32_0 : i32, i32
  }
  func.func @transform_2(%arg0: i32) -> (i32, i32) {
    %c0_i32 = arith.constant 0 : i32
    %c0_i32_0 = arith.constant 0 : i32
    %c0_i32_1 = arith.constant 0 : i32
    return %c0_i32, %c0_i32_0 : i32, i32
  }
  func.func @transform_3(%arg0: i32) -> (i32, i32) {
    %c0_i32 = arith.constant 0 : i32
    %c0_i32_0 = arith.constant 0 : i32
    %c0_i32_1 = arith.constant 0 : i32
    return %c0_i32, %c0_i32_0 : i32, i32
  }
  func.func @transform_4(%arg0: i32) -> (i32, i32) {
    %c0_i32 = arith.constant 0 : i32
    %c0_i32_0 = arith.constant 0 : i32
    %c0_i32_1 = arith.constant 0 : i32
    return %c0_i32, %c0_i32_0 : i32, i32
  }
  func.func @transform_5(%arg0: i32) -> (i32, i32) {
    %c0_i32 = arith.constant 0 : i32
    %c0_i32_0 = arith.constant 0 : i32
    %c0_i32_1 = arith.constant 0 : i32
    return %c0_i32, %c0_i32_0 : i32, i32
  }
  func.func @transform_6(%arg0: i32) -> (i32, i32) {
    %c0_i32 = arith.constant 0 : i32
    %c0_i32_0 = arith.constant 0 : i32
    %c0_i32_1 = arith.constant 0 : i32
    return %c0_i32, %c0_i32_0 : i32, i32
  }
  func.func @transform_7(%arg0: i32) -> (i32, i32) {
    %c0_i32 = arith.constant 0 : i32
    %c0_i32_0 = arith.constant 0 : i32
    return %c0_i32, %arg0 : i32, i32
  }
}

</mosaic_0001>

<llo_original>
// kernel: mlp_forward.1
$region0: #{mlp_forward.1}
  #allocation0 [shape = 'u32[]', space=smem, size = 0x4, offset = 0x4, fixed_abs, tag = 'smem constant byte address 0x4 - core index']
  #allocation1 [shape = 'u32[144,128]{1,0:T(1,128)}', space=vmem, size = 0x12000, scoped, tag = 'internal scratch']
  %s0 = inlined_call_operand.vmem [shape: s32[2,256], index: 0, kind: input, shape index: {}]
  %s1 = inlined_call_operand.vmem [shape: f32[16,10], index: 1, kind: input, shape index: {}]
  %s2 = inlined_call_operand.vmem [shape: f32[16,12], index: 2, kind: input, shape index: {}]
  %s3 = inlined_call_operand.vmem [shape: f32[32,16], index: 3, kind: input, shape index: {}]
  %s4 = inlined_call_operand.vmem [shape: f32[32,16], index: 4, kind: input, shape index: {}]
  %s5 = inlined_call_operand.vmem [shape: f32[16,32], index: 5, kind: input, shape index: {}]
  %s6 = inlined_call_operand.vmem [shape: f32[1,16], index: 6, kind: input, shape index: {}]
  %s7 = inlined_call_operand.vmem [shape: f32[1,256], index: 7, kind: output, shape index: {}]
  %s8 = sld [smem:[#allocation0]]
  $region38: #{mlp_forward.1} parent=0
    _
  %s10 = ssub.s32 1, %s8
  %s11 = scalar_select 0, %s10, %s8
  // Predicated region
  $region2: #{mlp_forward.1} parent=0 // pred_check
    _
  $region3: #{mlp_forward.1} parent=0 // pred_check_branch
    %13 = sbr.rel (0) target = $region5
  $region4: #{mlp_forward.1} parent=0 // pred_region
    _
  $region5: #{mlp_forward.1} parent=0 // pred_fallthru
    _
  // Predicated region
  $region6: #{mlp_forward.1} parent=0 // pred_check
    _
  $region7: #{mlp_forward.1} parent=0 // pred_check_branch
    %15 = sbr.rel (0) target = $region9
  $region8: #{mlp_forward.1} parent=0 // pred_region
    _
  $region9: #{mlp_forward.1} parent=0 // pred_fallthru
    _
  // Predicated region
  $region10: #{mlp_forward.1} parent=0 // pred_check
    _
  $region11: #{mlp_forward.1} parent=0 // pred_check_branch
    %17 = sbr.rel (0) target = $region13
  $region12: #{mlp_forward.1} parent=0 // pred_region
    _
  $region13: #{mlp_forward.1} parent=0 // pred_fallthru
    _
  // Predicated region
  $region14: #{mlp_forward.1} parent=0 // pred_check
    _
  $region15: #{mlp_forward.1} parent=0 // pred_check_branch
    %19 = sbr.rel (0) target = $region17
  $region16: #{mlp_forward.1} parent=0 // pred_region
    _
  $region17: #{mlp_forward.1} parent=0 // pred_fallthru
    _
  // Predicated region
  $region18: #{mlp_forward.1} parent=0 // pred_check
    _
  $region19: #{mlp_forward.1} parent=0 // pred_check_branch
    %21 = sbr.rel (0) target = $region21
  $region20: #{mlp_forward.1} parent=0 // pred_region
    _
  $region21: #{mlp_forward.1} parent=0 // pred_fallthru
    _
  // Predicated region
  $region22: #{mlp_forward.1} parent=0 // pred_check
    _
  $region23: #{mlp_forward.1} parent=0 // pred_check_branch
    %23 = sbr.rel (0) target = $region25
  $region24: #{mlp_forward.1} parent=0 // pred_region
    _
  $region25: #{mlp_forward.1} parent=0 // pred_fallthru
    _
  // Predicated region
  $region26: #{mlp_forward.1} parent=0 // pred_check
    _
  $region27: #{mlp_forward.1} parent=0 // pred_check_branch
    %25 = sbr.rel (0) target = $region29
  $region28: #{mlp_forward.1} parent=0 // pred_region
    _
  $region29: #{mlp_forward.1} parent=0 // pred_fallthru
    _
  %v26 = vld [vmem:[%s0] ss:$2 sm:$0x3]
  %s27 = scalar_lea.vmem %s0, 1
  %v28 = vld [vmem:[%s27] ss:$2 sm:$0x3]
  %v29 = vlaneseq
  %v30 = vshrl.u32 %v29, 7
  %v31 = vadd.s32 %v30, 8
  %v32 = vlaneseq
  %v33 = vshrl.u32 %v32, 7
  %v34 = vsub.s32 0, %v33
  %v35 = vrot.slane %v26, %v34
  %v36 = vlaneseq
  %v37 = vshrl.u32 %v36, 7
  %v38 = vsub.s32 1, %v37
  %v39 = vrot.slane %v26, %v38
  %vm40 = vcmp.eq.s32.totalorder %v30, %v35
  %vm41 = vcmp.eq.s32.totalorder %v30, %v39
  %vm42 = vcmp.eq.s32.totalorder %v31, %v35
  %vm43 = vcmp.eq.s32.totalorder %v31, %v39
  %v44 = vsel %vm40, 1, 0
  %v45 = vsel %vm41, 1, 0
  %v46 = vsel %vm42, 1, 0
  %v47 = vsel %vm43, 1, 0
  %v48 = vcvt.s32.f32 %v44
  %v49 = vcvt.s32.f32 %v45
  %v50 = vcvt.s32.f32 %v46
  %v51 = vcvt.s32.f32 %v47
  %v52 = vlaneseq
  %v53 = vshrl.u32 %v52, 7
  %v54 = vsub.s32 0, %v53
  %v55 = vrot.slane %v28, %v54
  %v56 = vlaneseq
  %v57 = vshrl.u32 %v56, 7
  %v58 = vsub.s32 1, %v57
  %v59 = vrot.slane %v28, %v58
  %vm60 = vcmp.eq.s32.totalorder %v30, %v55
  %vm61 = vcmp.eq.s32.totalorder %v30, %v59
  %vm62 = vcmp.eq.s32.totalorder %v31, %v55
  %vm63 = vcmp.eq.s32.totalorder %v31, %v59
  %v64 = vsel %vm60, 1, 0
  %v65 = vsel %vm61, 1, 0
  %v66 = vsel %vm62, 1, 0
  %v67 = vsel %vm63, 1, 0
  %v68 = vcvt.s32.f32 %v64
  %v69 = vcvt.s32.f32 %v65
  %v70 = vcvt.s32.f32 %v66
  %v71 = vcvt.s32.f32 %v67
  %v72 = vld [vmem:[%s1] sm:$0xff]
  %v73 = vld [vmem:[%s1 + $0x8] sm:$0xff]
  %vm74 = vcmask 80896
  %v76 = vsel %vm74, %v72, 0
  %v79 = vsel %vm74, %v73, 0
  %vm81 = vcmask 1041408
  %v83 = vsel %vm81, %v50, 0
  %v86 = vsel %vm81, %v51, 0
  %88 = vmatprep.subr.mxu0 0.0
  %89 = vmatpush1.msra.mxu0 0.0
  %90 = vmatprep.subr.mxu0 0.0
  %91 = vmatpush1.msra.mxu0 0.0
  %92 = vmatprep.subr.mxu0 0.0
  %93 = vmatpush1.msra.mxu0 0.0
  %94 = vmatprep.subr.mxu0 0.0
  %95 = vmatpush1.msra.mxu0 0.0
  %96 = vmatprep.subr.mxu0 0.0
  %97 = vmatpush1.msra.mxu0 0.0
  %98 = vmatprep.subr.mxu0 0.0
  %99 = vmatpush1.msra.mxu0 0.0
  %100 = vmatprep.subr.mxu0 0.0
  %101 = vmatpush1.msra.mxu0 0.0
  %102 = vmatprep.subr.mxu0 0.0
  %103 = vmatpush1.msra.mxu0 0.0
  %104 = vmatprep.subr.mxu0 0.0
  %105 = vmatpush1.msra.mxu0 0.0
  %106 = vmatprep.subr.mxu0 0.0
  %107 = vmatpush1.msra.mxu0 0.0
  %108 = vmatprep.subr.mxu0 0.0
  %109 = vmatpush1.msra.mxu0 0.0
  %110 = vmatprep.subr.mxu0 0.0
  %111 = vmatpush1.msra.mxu0 0.0
  %112 = vmatprep.subr.mxu0 0.0
  %113 = vmatpush1.msra.mxu0 0.0
  %114 = vmatprep.subr.mxu0 0.0
  %115 = vmatpush1.msra.mxu0 0.0
  %116 = vmatprep.subr.mxu0 %v86
  %117 = vmatpush1.msra.mxu0 %v83
  %118 = vmatprep.subr.mxu0 %v49
  %119 = vmatpush1.msra.mxu0 %v48
  %120 = vmatprep.subr.mxu0 0.0
  %121 = vmatpush2.msra.mxu0 0.0
  %122 = vmatprep.subr.mxu0 0.0
  %123 = vmatpush2.msra.mxu0 0.0
  %124 = vmatprep.subr.mxu0 0.0
  %125 = vmatpush2.msra.mxu0 0.0
  %126 = vmatprep.subr.mxu0 0.0
  %127 = vmatpush2.msra.mxu0 0.0
  %128 = vmatprep.subr.mxu0 0.0
  %129 = vmatpush2.msra.mxu0 0.0
  %130 = vmatprep.subr.mxu0 0.0
  %131 = vmatpush2.msra.mxu0 0.0
  %132 = vmatprep.subr.mxu0 0.0
  %133 = vmatpush2.msra.mxu0 0.0
  %134 = vmatprep.subr.mxu0 0.0
  %135 = vmatpush2.msra.mxu0 0.0
  %136 = vmatprep.subr.mxu0 0.0
  %137 = vmatpush2.msra.mxu0 0.0
  %138 = vmatprep.subr.mxu0 0.0
  %139 = vmatpush2.msra.mxu0 0.0
  %140 = vmatprep.subr.mxu0 0.0
  %141 = vmatpush2.msra.mxu0 0.0
  %142 = vmatprep.subr.mxu0 0.0
  %143 = vmatpush2.msra.mxu0 0.0
  %144 = vmatprep.subr.mxu0 0.0
  %145 = vmatpush2.msra.mxu0 0.0
  %146 = vmatprep.subr.mxu0 0.0
  %147 = vmatpush2.msra.mxu0 0.0
  %148 = vmatprep.subr.mxu0 0.0
  %149 = vmatpush2.msra.mxu0 0.0
  %150 = vmatprep.subr.mxu0 0.0
  %151 = vmatpush2.msra.mxu0 0.0
  %152 = vmatprep.mubr.f32.mxu0 0.0
  %153 = vmatmul.mubr.f32.gmra.mxu0 %v76
  %v154 = vpop.f32.mrf.mxu0
  %v155 = vadd.f32 0.0, %v154
  %v156 = vpop.f32.mrf.mxu0
  %v157 = vadd.f32 0.0, %v156
  %158 = vmatprep.mubr.f32.mxu0 0.0
  %159 = vmatmul.mubr.f32.gmra.mxu0 %v79
  %v160 = vpop.f32.mrf.mxu0
  %v161 = vadd.f32 0.0, %v160
  %v162 = vpop.f32.mrf.mxu0
  %v163 = vadd.f32 0.0, %v162
  %164 = vdwg.mxu0
  %v165 = vld [vmem:[%s2] sm:$0xff]
  %v166 = vld [vmem:[%s2 + $0x8] sm:$0xff]
  %vm167 = vcmask 97280
  %v169 = vsel %vm167, %v165, 0
  %v172 = vsel %vm167, %v166, 0
  %vm174 = vcmask 1043456
  %v176 = vsel %vm174, %v70, 0
  %v179 = vsel %vm174, %v71, 0
  %181 = vmatprep.subr.mxu0 0.0
  %182 = vmatpush1.msra.mxu0 0.0
  %183 = vmatprep.subr.mxu0 0.0
  %184 = vmatpush1.msra.mxu0 0.0
  %185 = vmatprep.subr.mxu0 0.0
  %186 = vmatpush1.msra.mxu0 0.0
  %187 = vmatprep.subr.mxu0 0.0
  %188 = vmatpush1.msra.mxu0 0.0
  %189 = vmatprep.subr.mxu0 0.0
  %190 = vmatpush1.msra.mxu0 0.0
  %191 = vmatprep.subr.mxu0 0.0
  %192 = vmatpush1.msra.mxu0 0.0
  %193 = vmatprep.subr.mxu0 0.0
  %194 = vmatpush1.msra.mxu0 0.0
  %195 = vmatprep.subr.mxu0 0.0
  %196 = vmatpush1.msra.mxu0 0.0
  %197 = vmatprep.subr.mxu0 0.0
  %198 = vmatpush1.msra.mxu0 0.0
  %199 = vmatprep.subr.mxu0 0.0
  %200 = vmatpush1.msra.mxu0 0.0
  %201 = vmatprep.subr.mxu0 0.0
  %202 = vmatpush1.msra.mxu0 0.0
  %203 = vmatprep.subr.mxu0 0.0
  %204 = vmatpush1.msra.mxu0 0.0
  %205 = vmatprep.subr.mxu0 0.0
  %206 = vmatpush1.msra.mxu0 0.0
  %207 = vmatprep.subr.mxu0 0.0
  %208 = vmatpush1.msra.mxu0 0.0
  %209 = vmatprep.subr.mxu0 %v179
  %210 = vmatpush1.msra.mxu0 %v176
  %211 = vmatprep.subr.mxu0 %v69
  %212 = vmatpush1.msra.mxu0 %v68
  %213 = vmatprep.subr.mxu0 0.0
  %214 = vmatpush2.msra.mxu0 0.0
  %215 = vmatprep.subr.mxu0 0.0
  %216 = vmatpush2.msra.mxu0 0.0
  %217 = vmatprep.subr.mxu0 0.0
  %218 = vmatpush2.msra.mxu0 0.0
  %219 = vmatprep.subr.mxu0 0.0
  %220 = vmatpush2.msra.mxu0 0.0
  %221 = vmatprep.subr.mxu0 0.0
  %222 = vmatpush2.msra.mxu0 0.0
  %223 = vmatprep.subr.mxu0 0.0
  %224 = vmatpush2.msra.mxu0 0.0
  %225 = vmatprep.subr.mxu0 0.0
  %226 = vmatpush2.msra.mxu0 0.0
  %227 = vmatprep.subr.mxu0 0.0
  %228 = vmatpush2.msra.mxu0 0.0
  %229 = vmatprep.subr.mxu0 0.0
  %230 = vmatpush2.msra.mxu0 0.0
  %231 = vmatprep.subr.mxu0 0.0
  %232 = vmatpush2.msra.mxu0 0.0
  %233 = vmatprep.subr.mxu0 0.0
  %234 = vmatpush2.msra.mxu0 0.0
  %235 = vmatprep.subr.mxu0 0.0
  %236 = vmatpush2.msra.mxu0 0.0
  %237 = vmatprep.subr.mxu0 0.0
  %238 = vmatpush2.msra.mxu0 0.0
  %239 = vmatprep.subr.mxu0 0.0
  %240 = vmatpush2.msra.mxu0 0.0
  %241 = vmatprep.subr.mxu0 0.0
  %242 = vmatpush2.msra.mxu0 0.0
  %243 = vmatprep.subr.mxu0 0.0
  %244 = vmatpush2.msra.mxu0 0.0
  %245 = vmatprep.mubr.f32.mxu0 0.0
  %246 = vmatmul.mubr.f32.gmra.mxu0 %v169
  %v247 = vpop.f32.mrf.mxu0
  %v248 = vadd.f32 0.0, %v247
  %v249 = vpop.f32.mrf.mxu0
  %v250 = vadd.f32 0.0, %v249
  %251 = vmatprep.mubr.f32.mxu0 0.0
  %252 = vmatmul.mubr.f32.gmra.mxu0 %v172
  %v253 = vpop.f32.mrf.mxu0
  %v254 = vadd.f32 0.0, %v253
  %v255 = vpop.f32.mrf.mxu0
  %v256 = vadd.f32 0.0, %v255
  %257 = vdwg.mxu0
  %v258 = vld [vmem:[%s3] sm:$0xff]
  %v259 = vld [vmem:[%s3 + $0x8] sm:$0xff]
  %v260 = vld [vmem:[%s3 + $0x10] sm:$0xff]
  %v261 = vld [vmem:[%s3 + $0x18] sm:$0xff]
  %v262 = vld [vmem:[%s4] sm:$0xff]
  %v263 = vld [vmem:[%s4 + $0x8] sm:$0xff]
  %v264 = vld [vmem:[%s4 + $0x10] sm:$0xff]
  %v265 = vld [vmem:[%s4 + $0x18] sm:$0xff]
  %vm266 = vcmask 130048
  %v268 = vsel %vm266, %v262, 0
  %v271 = vsel %vm266, %v263, 0
  %v274 = vsel %vm266, %v264, 0
  %v277 = vsel %vm266, %v265, 0
  %279 = vmatprep.subr.mxu0 0.0
  %280 = vmatpush1.msra.mxu0 0.0
  %281 = vmatprep.subr.mxu0 0.0
  %282 = vmatpush1.msra.mxu0 0.0
  %283 = vmatprep.subr.mxu0 0.0
  %284 = vmatpush1.msra.mxu0 0.0
  %285 = vmatprep.subr.mxu0 0.0
  %286 = vmatpush1.msra.mxu0 0.0
  %287 = vmatprep.subr.mxu0 0.0
  %288 = vmatpush1.msra.mxu0 0.0
  %289 = vmatprep.subr.mxu0 0.0
  %290 = vmatpush1.msra.mxu0 0.0
  %291 = vmatprep.subr.mxu0 0.0
  %292 = vmatpush1.msra.mxu0 0.0
  %293 = vmatprep.subr.mxu0 0.0
  %294 = vmatpush1.msra.mxu0 0.0
  %295 = vmatprep.subr.mxu0 0.0
  %296 = vmatpush1.msra.mxu0 0.0
  %297 = vmatprep.subr.mxu0 0.0
  %298 = vmatpush1.msra.mxu0 0.0
  %299 = vmatprep.subr.mxu0 0.0
  %300 = vmatpush1.msra.mxu0 0.0
  %301 = vmatprep.subr.mxu0 0.0
  %302 = vmatpush1.msra.mxu0 0.0
  %303 = vmatprep.subr.mxu0 0.0
  %304 = vmatpush1.msra.mxu0 0.0
  %305 = vmatprep.subr.mxu0 0.0
  %306 = vmatpush1.msra.mxu0 0.0
  %307 = vmatprep.subr.mxu0 %v256
  %308 = vmatpush1.msra.mxu0 %v254
  %309 = vmatprep.subr.mxu0 %v250
  %310 = vmatpush1.msra.mxu0 %v248
  %311 = vmatprep.subr.mxu0 0.0
  %312 = vmatpush2.msra.mxu0 0.0
  %313 = vmatprep.subr.mxu0 0.0
  %314 = vmatpush2.msra.mxu0 0.0
  %315 = vmatprep.subr.mxu0 0.0
  %316 = vmatpush2.msra.mxu0 0.0
  %317 = vmatprep.subr.mxu0 0.0
  %318 = vmatpush2.msra.mxu0 0.0
  %319 = vmatprep.subr.mxu0 0.0
  %320 = vmatpush2.msra.mxu0 0.0
  %321 = vmatprep.subr.mxu0 0.0
  %322 = vmatpush2.msra.mxu0 0.0
  %323 = vmatprep.subr.mxu0 0.0
  %324 = vmatpush2.msra.mxu0 0.0
  %325 = vmatprep.subr.mxu0 0.0
  %326 = vmatpush2.msra.mxu0 0.0
  %327 = vmatprep.subr.mxu0 0.0
  %328 = vmatpush2.msra.mxu0 0.0
  %329 = vmatprep.subr.mxu0 0.0
  %330 = vmatpush2.msra.mxu0 0.0
  %331 = vmatprep.subr.mxu0 0.0
  %332 = vmatpush2.msra.mxu0 0.0
  %333 = vmatprep.subr.mxu0 0.0
  %334 = vmatpush2.msra.mxu0 0.0
  %335 = vmatprep.subr.mxu0 0.0
  %336 = vmatpush2.msra.mxu0 0.0
  %337 = vmatprep.subr.mxu0 0.0
  %338 = vmatpush2.msra.mxu0 0.0
  %339 = vmatprep.subr.mxu0 0.0
  %340 = vmatpush2.msra.mxu0 0.0
  %341 = vmatprep.subr.mxu0 0.0
  %342 = vmatpush2.msra.mxu0 0.0
  %343 = vmatprep.mubr.f32.mxu0 0.0
  %344 = vmatmul.mubr.f32.gmra.mxu0 %v268
  %v345 = vpop.f32.mrf.mxu0
  %v346 = vadd.f32 0.0, %v345
  %v347 = vpop.f32.mrf.mxu0
  %v348 = vadd.f32 0.0, %v347
  %349 = vmatprep.mubr.f32.mxu0 0.0
  %350 = vmatmul.mubr.f32.gmra.mxu0 %v271
  %v351 = vpop.f32.mrf.mxu0
  %v352 = vadd.f32 0.0, %v351
  %v353 = vpop.f32.mrf.mxu0
  %v354 = vadd.f32 0.0, %v353
  %355 = vmatprep.mubr.f32.mxu0 0.0
  %356 = vmatmul.mubr.f32.gmra.mxu0 %v274
  %v357 = vpop.f32.mrf.mxu0
  %v358 = vadd.f32 0.0, %v357
  %v359 = vpop.f32.mrf.mxu0
  %v360 = vadd.f32 0.0, %v359
  %361 = vmatprep.mubr.f32.mxu0 0.0
  %362 = vmatmul.mubr.f32.gmra.mxu0 %v277
  %v363 = vpop.f32.mrf.mxu0
  %v364 = vadd.f32 0.0, %v363
  %v365 = vpop.f32.mrf.mxu0
  %v366 = vadd.f32 0.0, %v365
  %367 = vdwg.mxu0
  %v369 = vsel %vm266, %v258, 0
  %v372 = vsel %vm266, %v259, 0
  %v375 = vsel %vm266, %v260, 0
  %v378 = vsel %vm266, %v261, 0
  %380 = vmatprep.subr.mxu0 0.0
  %381 = vmatpush1.msra.mxu0 0.0
  %382 = vmatprep.subr.mxu0 0.0
  %383 = vmatpush1.msra.mxu0 0.0
  %384 = vmatprep.subr.mxu0 0.0
  %385 = vmatpush1.msra.mxu0 0.0
  %386 = vmatprep.subr.mxu0 0.0
  %387 = vmatpush1.msra.mxu0 0.0
  %388 = vmatprep.subr.mxu0 0.0
  %389 = vmatpush1.msra.mxu0 0.0
  %390 = vmatprep.subr.mxu0 0.0
  %391 = vmatpush1.msra.mxu0 0.0
  %392 = vmatprep.subr.mxu0 0.0
  %393 = vmatpush1.msra.mxu0 0.0
  %394 = vmatprep.subr.mxu0 0.0
  %395 = vmatpush1.msra.mxu0 0.0
  %396 = vmatprep.subr.mxu0 0.0
  %397 = vmatpush1.msra.mxu0 0.0
  %398 = vmatprep.subr.mxu0 0.0
  %399 = vmatpush1.msra.mxu0 0.0
  %400 = vmatprep.subr.mxu0 0.0
  %401 = vmatpush1.msra.mxu0 0.0
  %402 = vmatprep.subr.mxu0 0.0
  %403 = vmatpush1.msra.mxu0 0.0
  %404 = vmatprep.subr.mxu0 0.0
  %405 = vmatpush1.msra.mxu0 0.0
  %406 = vmatprep.subr.mxu0 0.0
  %407 = vmatpush1.msra.mxu0 0.0
  %408 = vmatprep.subr.mxu0 %v163
  %409 = vmatpush1.msra.mxu0 %v161
  %410 = vmatprep.subr.mxu0 %v157
  %411 = vmatpush1.msra.mxu0 %v155
  %412 = vmatprep.subr.mxu0 0.0
  %413 = vmatpush2.msra.mxu0 0.0
  %414 = vmatprep.subr.mxu0 0.0
  %415 = vmatpush2.msra.mxu0 0.0
  %416 = vmatprep.subr.mxu0 0.0
  %417 = vmatpush2.msra.mxu0 0.0
  %418 = vmatprep.subr.mxu0 0.0
  %419 = vmatpush2.msra.mxu0 0.0
  %420 = vmatprep.subr.mxu0 0.0
  %421 = vmatpush2.msra.mxu0 0.0
  %422 = vmatprep.subr.mxu0 0.0
  %423 = vmatpush2.msra.mxu0 0.0
  %424 = vmatprep.subr.mxu0 0.0
  %425 = vmatpush2.msra.mxu0 0.0
  %426 = vmatprep.subr.mxu0 0.0
  %427 = vmatpush2.msra.mxu0 0.0
  %428 = vmatprep.subr.mxu0 0.0
  %429 = vmatpush2.msra.mxu0 0.0
  %430 = vmatprep.subr.mxu0 0.0
  %431 = vmatpush2.msra.mxu0 0.0
  %432 = vmatprep.subr.mxu0 0.0
  %433 = vmatpush2.msra.mxu0 0.0
  %434 = vmatprep.subr.mxu0 0.0
  %435 = vmatpush2.msra.mxu0 0.0
  %436 = vmatprep.subr.mxu0 0.0
  %437 = vmatpush2.msra.mxu0 0.0
  %438 = vmatprep.subr.mxu0 0.0
  %439 = vmatpush2.msra.mxu0 0.0
  %440 = vmatprep.subr.mxu0 0.0
  %441 = vmatpush2.msra.mxu0 0.0
  %442 = vmatprep.subr.mxu0 0.0
  %443 = vmatpush2.msra.mxu0 0.0
  %444 = vmatprep.mubr.f32.mxu0 0.0
  %445 = vmatmul.mubr.f32.gmra.mxu0 %v369
  %v446 = vpop.f32.mrf.mxu0
  %v447 = vadd.f32 %v346, %v446
  %v448 = vpop.f32.mrf.mxu0
  %v449 = vadd.f32 %v348, %v448
  %450 = vmatprep.mubr.f32.mxu0 0.0
  %451 = vmatmul.mubr.f32.gmra.mxu0 %v372
  %v452 = vpop.f32.mrf.mxu0
  %v453 = vadd.f32 %v352, %v452
  %v454 = vpop.f32.mrf.mxu0
  %v455 = vadd.f32 %v354, %v454
  %456 = vmatprep.mubr.f32.mxu0 0.0
  %457 = vmatmul.mubr.f32.gmra.mxu0 %v375
  %v458 = vpop.f32.mrf.mxu0
  %v459 = vadd.f32 %v358, %v458
  %v460 = vpop.f32.mrf.mxu0
  %v461 = vadd.f32 %v360, %v460
  %462 = vmatprep.mubr.f32.mxu0 0.0
  %463 = vmatmul.mubr.f32.gmra.mxu0 %v378
  %v464 = vpop.f32.mrf.mxu0
  %v465 = vadd.f32 %v364, %v464
  %v466 = vpop.f32.mrf.mxu0
  %v467 = vadd.f32 %v366, %v466
  %468 = vdwg.mxu0
  %v469 = vmax.f32 %v447, 0.0
  %v470 = vmax.f32 %v449, 0.0
  %v471 = vmax.f32 %v453, 0.0
  %v472 = vmax.f32 %v455, 0.0
  %v473 = vmax.f32 %v459, 0.0
  %v474 = vmax.f32 %v461, 0.0
  %v475 = vmax.f32 %v465, 0.0
  %v476 = vmax.f32 %v467, 0.0
  %v477 = vld [vmem:[%s5] sm:$0xff]
  %v478 = vld [vmem:[%s5 + $0x8] sm:$0xff]
  %vm479 = vcmask 261120
  %v481 = vsel %vm479, %v477, 0
  %v484 = vsel %vm479, %v478, 0
  %486 = vmatprep.subr.mxu0 0.0
  %487 = vmatpush1.msra.mxu0 0.0
  %488 = vmatprep.subr.mxu0 0.0
  %489 = vmatpush1.msra.mxu0 0.0
  %490 = vmatprep.subr.mxu0 0.0
  %491 = vmatpush1.msra.mxu0 0.0
  %492 = vmatprep.subr.mxu0 0.0
  %493 = vmatpush1.msra.mxu0 0.0
  %494 = vmatprep.subr.mxu0 0.0
  %495 = vmatpush1.msra.mxu0 0.0
  %496 = vmatprep.subr.mxu0 0.0
  %497 = vmatpush1.msra.mxu0 0.0
  %498 = vmatprep.subr.mxu0 0.0
  %499 = vmatpush1.msra.mxu0 0.0
  %500 = vmatprep.subr.mxu0 0.0
  %501 = vmatpush1.msra.mxu0 0.0
  %502 = vmatprep.subr.mxu0 0.0
  %503 = vmatpush1.msra.mxu0 0.0
  %504 = vmatprep.subr.mxu0 0.0
  %505 = vmatpush1.msra.mxu0 0.0
  %506 = vmatprep.subr.mxu0 0.0
  %507 = vmatpush1.msra.mxu0 0.0
  %508 = vmatprep.subr.mxu0 0.0
  %509 = vmatpush1.msra.mxu0 0.0
  %510 = vmatprep.subr.mxu0 %v476
  %511 = vmatpush1.msra.mxu0 %v475
  %512 = vmatprep.subr.mxu0 %v474
  %513 = vmatpush1.msra.mxu0 %v473
  %514 = vmatprep.subr.mxu0 %v472
  %515 = vmatpush1.msra.mxu0 %v471
  %516 = vmatprep.subr.mxu0 %v470
  %517 = vmatpush1.msra.mxu0 %v469
  %518 = vmatprep.subr.mxu0 0.0
  %519 = vmatpush2.msra.mxu0 0.0
  %520 = vmatprep.subr.mxu0 0.0
  %521 = vmatpush2.msra.mxu0 0.0
  %522 = vmatprep.subr.mxu0 0.0
  %523 = vmatpush2.msra.mxu0 0.0
  %524 = vmatprep.subr.mxu0 0.0
  %525 = vmatpush2.msra.mxu0 0.0
  %526 = vmatprep.subr.mxu0 0.0
  %527 = vmatpush2.msra.mxu0 0.0
  %528 = vmatprep.subr.mxu0 0.0
  %529 = vmatpush2.msra.mxu0 0.0
  %530 = vmatprep.subr.mxu0 0.0
  %531 = vmatpush2.msra.mxu0 0.0
  %532 = vmatprep.subr.mxu0 0.0
  %533 = vmatpush2.msra.mxu0 0.0
  %534 = vmatprep.subr.mxu0 0.0
  %535 = vmatpush2.msra.mxu0 0.0
  %536 = vmatprep.subr.mxu0 0.0
  %537 = vmatpush2.msra.mxu0 0.0
  %538 = vmatprep.subr.mxu0 0.0
  %539 = vmatpush2.msra.mxu0 0.0
  %540 = vmatprep.subr.mxu0 0.0
  %541 = vmatpush2.msra.mxu0 0.0
  %542 = vmatprep.subr.mxu0 0.0
  %543 = vmatpush2.msra.mxu0 0.0
  %544 = vmatprep.subr.mxu0 0.0
  %545 = vmatpush2.msra.mxu0 0.0
  %546 = vmatprep.subr.mxu0 0.0
  %547 = vmatpush2.msra.mxu0 0.0
  %548 = vmatprep.subr.mxu0 0.0
  %549 = vmatpush2.msra.mxu0 0.0
  %550 = vmatprep.mubr.f32.mxu0 0.0
  %551 = vmatmul.mubr.f32.gmra.mxu0 %v481
  %v552 = vpop.f32.mrf.mxu0
  %v553 = vadd.f32 0.0, %v552
  %v554 = vpop.f32.mrf.mxu0
  %v555 = vadd.f32 0.0, %v554
  %556 = vmatprep.mubr.f32.mxu0 0.0
  %557 = vmatmul.mubr.f32.gmra.mxu0 %v484
  %v558 = vpop.f32.mrf.mxu0
  %v559 = vadd.f32 0.0, %v558
  %v560 = vpop.f32.mrf.mxu0
  %v561 = vadd.f32 0.0, %v560
  %562 = vdwg.mxu0
  %v563 = vmax.f32 %v553, 0.0
  %v564 = vmax.f32 %v555, 0.0
  %v565 = vmax.f32 %v559, 0.0
  %v566 = vmax.f32 %v561, 0.0
  %v567 = vld [vmem:[%s6] sm:$0x1]
  %v569 = vsel %vm266, %v567, 0
  %571 = vmatprep.subr.mxu0 0.0
  %572 = vmatpush1.msra.mxu0 0.0
  %573 = vmatprep.subr.mxu0 0.0
  %574 = vmatpush1.msra.mxu0 0.0
  %575 = vmatprep.subr.mxu0 0.0
  %576 = vmatpush1.msra.mxu0 0.0
  %577 = vmatprep.subr.mxu0 0.0
  %578 = vmatpush1.msra.mxu0 0.0
  %579 = vmatprep.subr.mxu0 0.0
  %580 = vmatpush1.msra.mxu0 0.0
  %581 = vmatprep.subr.mxu0 0.0
  %582 = vmatpush1.msra.mxu0 0.0
  %583 = vmatprep.subr.mxu0 0.0
  %584 = vmatpush1.msra.mxu0 0.0
  %585 = vmatprep.subr.mxu0 0.0
  %586 = vmatpush1.msra.mxu0 0.0
  %587 = vmatprep.subr.mxu0 0.0
  %588 = vmatpush1.msra.mxu0 0.0
  %589 = vmatprep.subr.mxu0 0.0
  %590 = vmatpush1.msra.mxu0 0.0
  %591 = vmatprep.subr.mxu0 0.0
  %592 = vmatpush1.msra.mxu0 0.0
  %593 = vmatprep.subr.mxu0 0.0
  %594 = vmatpush1.msra.mxu0 0.0
  %595 = vmatprep.subr.mxu0 0.0
  %596 = vmatpush1.msra.mxu0 0.0
  %597 = vmatprep.subr.mxu0 0.0
  %598 = vmatpush1.msra.mxu0 0.0
  %599 = vmatprep.subr.mxu0 %v566
  %600 = vmatpush1.msra.mxu0 %v565
  %601 = vmatprep.subr.mxu0 %v564
  %602 = vmatpush1.msra.mxu0 %v563
  %603 = vmatprep.subr.mxu0 0.0
  %604 = vmatpush2.msra.mxu0 0.0
  %605 = vmatprep.subr.mxu0 0.0
  %606 = vmatpush2.msra.mxu0 0.0
  %607 = vmatprep.subr.mxu0 0.0
  %608 = vmatpush2.msra.mxu0 0.0
  %609 = vmatprep.subr.mxu0 0.0
  %610 = vmatpush2.msra.mxu0 0.0
  %611 = vmatprep.subr.mxu0 0.0
  %612 = vmatpush2.msra.mxu0 0.0
  %613 = vmatprep.subr.mxu0 0.0
  %614 = vmatpush2.msra.mxu0 0.0
  %615 = vmatprep.subr.mxu0 0.0
  %616 = vmatpush2.msra.mxu0 0.0
  %617 = vmatprep.subr.mxu0 0.0
  %618 = vmatpush2.msra.mxu0 0.0
  %619 = vmatprep.subr.mxu0 0.0
  %620 = vmatpush2.msra.mxu0 0.0
  %621 = vmatprep.subr.mxu0 0.0
  %622 = vmatpush2.msra.mxu0 0.0
  %623 = vmatprep.subr.mxu0 0.0
  %624 = vmatpush2.msra.mxu0 0.0
  %625 = vmatprep.subr.mxu0 0.0
  %626 = vmatpush2.msra.mxu0 0.0
  %627 = vmatprep.subr.mxu0 0.0
  %628 = vmatpush2.msra.mxu0 0.0
  %629 = vmatprep.subr.mxu0 0.0
  %630 = vmatpush2.msra.mxu0 0.0
  %631 = vmatprep.subr.mxu0 0.0
  %632 = vmatpush2.msra.mxu0 0.0
  %633 = vmatprep.subr.mxu0 0.0
  %634 = vmatpush2.msra.mxu0 0.0
  %635 = vmatprep.mubr.f32.mxu0 0.0
  %636 = vmatmul.mubr.f32.gmra.mxu0 %v569
  %v637 = vpop.f32.mrf.mxu0
  %v638 = vadd.f32 0.0, %v637
  %v639 = vpop.f32.mrf.mxu0
  %v640 = vadd.f32 0.0, %v639
  %641 = vdwg.mxu0
  %v642 = vxor.u32 %v638, 2147483648
  %v643 = vxor.u32 %v640, 2147483648
  %v644 = vmul.f32 %v642, 1.442695
  %v645 = vpow.pop %v644
  %v646 = vmul.f32 %v643, 1.442695
  %v647 = vpow.pop %v646
  %v648 = vadd.f32 %v645, 1.0
  %v649 = vadd.f32 %v647, 1.0
  %v650 = vrcp.pop %v648
  %v651 = vmul.f32 1.0, %v650
  %v652 = vrcp.pop %v649
  %v653 = vmul.f32 1.0, %v652
  %v656 = vcombine.low %v651, %v653
  %v658 = vunpack.c.l.s4 1966171168
  %v659 = vunpack.c.0.s8 %v658
  %v660 = vlaneseq
  %v661 = vshrl.u32 %v660, 7
  %v662 = vsub.s32 %v659, %v661
  %v663 = vrot.slane %v656, %v662
  %v665 = vunpack.c.l.s4 1966171168
  %v666 = vunpack.c.0.s8 %v665
  %v667 = vlaneseq
  %v668 = vshrl.u32 %v667, 7
  %v669 = vsub.s32 %v666, %v668
  %v670 = vrot.slane %v663, %v669
  %v672 = vlaneseq
  %vm673 = vcmp.ge.s32.totalorder %v672, 0
  %vm674 = vcmp.lt.s32.totalorder %v672, 256
  %vm675 = vmand %vm673, %vm674
  %676 = vst.msk [vmem:[%s7] sm:$0x3] %vm675, %v670
  // Predicated region
  $region30: #{mlp_forward.1} parent=0 // pred_check
    _
  $region31: #{mlp_forward.1} parent=0 // pred_check_branch
    %678 = sbr.rel (0) target = $region33
  $region32: #{mlp_forward.1} parent=0 // pred_region
    _
  $region33: #{mlp_forward.1} parent=0 // pred_fallthru
    _
  // Predicated region
  $region34: #{mlp_forward.1} parent=0 // pred_check
    _
  $region35: #{mlp_forward.1} parent=0 // pred_check_branch
    %680 = sbr.rel (0) target = $region37
  $region36: #{mlp_forward.1} parent=0 // pred_region
    _
  $region37: #{mlp_forward.1} parent=0 // pred_fallthru
    _

</llo_original>
